<compile_context>
chip_gen: v7x
topology: tpu7x:2x2x1
jax: 0.10.0
libtpu: 0.0.40
codegen_flags: <defaults>
</compile_context>

<pallas_src>
import functools

import jax
import jax.numpy as jnp
from jax.experimental import pallas as pl
from jax.experimental.pallas import tpu as pltpu


# ---------------------------------------------------------------------------
# Kernels
# ---------------------------------------------------------------------------

def _mlp_att(avg_pool, max_pool, w1, b1, w2, b2):
    """mlp(avg) + mlp(max) in f32 (b2 counted twice, matching PyTorch)."""
    def mlp(p):
        h = jnp.dot(p, w1, preferred_element_type=jnp.float32) + b1
        h = jnp.maximum(h, 0.0)
        return jnp.dot(h, w2, preferred_element_type=jnp.float32) + b2
    return mlp(avg_pool) + mlp(max_pool)


def _gate_fused_kernel(x_ref, w1_ref, b1_ref, w2_ref, b2_ref, o_ref, *, hw_valid):
    # x block: (Bb, C, HWp) -- lane axis = HW (lane-dense), sublane axis = C.
    x = x_ref[...]
    xf = x.astype(jnp.float32)
    hw_pad = xf.shape[-1]

    if hw_pad != hw_valid:
        # Padded lanes must not contribute to the mean / max.
        lane = jax.lax.broadcasted_iota(jnp.int32, xf.shape, 2)
        valid = lane < hw_valid
        x_sum = jnp.where(valid, xf, 0.0).sum(axis=-1)            # (Bb, C)
        x_max = jnp.where(valid, xf, -jnp.inf).max(axis=-1)       # (Bb, C)
    else:
        x_sum = xf.sum(axis=-1)
        x_max = xf.max(axis=-1)

    avg_pool = x_sum * (1.0 / hw_valid)                           # (Bb, C)

    att = _mlp_att(avg_pool, x_max,
                   w1_ref[...].astype(jnp.float32), b1_ref[...].astype(jnp.float32),
                   w2_ref[...].astype(jnp.float32), b2_ref[...].astype(jnp.float32))
    scale = jax.nn.sigmoid(att)                                   # (Bb, C) f32

    # Broadcast the gate over the lane (HW) axis; lane-dense store.
    o_ref[...] = (x * scale[:, :, None].astype(x.dtype)).astype(o_ref.dtype)


def _scale_accum_kernel(x_ref, w1_ref, b1_ref, w2_ref, b2_ref, s_ref,
                        sum_sc, max_sc, *, hw_valid, block_hw):
    # Pass 1 of the HW-tiled fallback: running sum/max over HW tiles,
    # MLP + sigmoid on the last HW step.
    h = pl.program_id(1)

    @pl.when(h == 0)
    def _():
        sum_sc[...] = jnp.zeros_like(sum_sc)
        max_sc[...] = jnp.full(max_sc.shape, -jnp.inf, dtype=max_sc.dtype)

    x = x_ref[...].astype(jnp.float32)                            # (Bb, C, thw)
    if hw_valid % block_hw != 0:
        lane = jax.lax.broadcasted_iota(jnp.int32, x.shape, 2) + h * block_hw
        valid = lane < hw_valid
        sum_sc[...] = sum_sc[...] + jnp.where(valid, x, 0.0).sum(axis=-1)
        max_sc[...] = jnp.maximum(max_sc[...],
                                  jnp.where(valid, x, -jnp.inf).max(axis=-1))
    else:
        sum_sc[...] = sum_sc[...] + x.sum(axis=-1)
        max_sc[...] = jnp.maximum(max_sc[...], x.max(axis=-1))

    @pl.when(h == pl.num_programs(1) - 1)
    def _():
        avg_pool = sum_sc[...] * (1.0 / hw_valid)
        att = _mlp_att(avg_pool, max_sc[...],
                       w1_ref[...].astype(jnp.float32), b1_ref[...].astype(jnp.float32),
                       w2_ref[...].astype(jnp.float32), b2_ref[...].astype(jnp.float32))
        s_ref[...] = jax.nn.sigmoid(att)[:, :, None].astype(s_ref.dtype)


def _apply_scale_kernel(x_ref, s_ref, o_ref):
    # Pass 2 of the HW-tiled fallback: stream x and apply the (Bb, C, 1) gate.
    x = x_ref[...]
    o_ref[...] = (x * s_ref[...].astype(x.dtype)).astype(o_ref.dtype)


# ---------------------------------------------------------------------------
# Wrapper
# ---------------------------------------------------------------------------

def _safe_vmem_cap():
    """Physical per-core VMEM minus headroom for Mosaic internal scratch."""
    cap = 64 * 2**20  # conservative default (v7x per-TensorCore)
    get_info = getattr(pltpu, "get_tpu_info", None)
    if get_info is not None:
        try:
            c = int(get_info().vmem_capacity_bytes)
            if c > 0:
                cap = c
        except Exception:
            pass
    return max(16 * 2**20, cap - 12 * 2**20)


def _channel_gate_hw_tiled(x, w1, b1, w2, b2, B, C, HW, Ch, itemsize,
                           weight_bytes, vmem_cap, target_step_bytes, block_hw):
    """Fallback for images too large to be VMEM-resident: tile over HW."""
    if block_hw is None:
        thw = (target_step_bytes // max(C * itemsize, 1)) // 128 * 128
        hw_cap = (HW // 128) * 128 if HW >= 128 else HW
        block_hw = int(max(128, min(max(thw, 128), max(hw_cap, 128))))
        block_hw = min(block_hw, hw_cap) if hw_cap >= 128 else HW
    n_hw = pl.cdiv(HW, block_hw)

    block_b = 1                      # images are huge by definition here
    grid_b = pl.cdiv(B, block_b)

    tile_bytes = block_b * C * block_hw * itemsize
    vmem_limit = int(min(vmem_cap,
                         max(16 * 2**20, 4 * tile_bytes + weight_bytes + 2 * 2**20)))

    scale = pl.pallas_call(
        functools.partial(_scale_accum_kernel, hw_valid=HW, block_hw=block_hw),
        out_shape=jax.ShapeDtypeStruct((B, C, 1), jnp.float32),
        grid_spec=pltpu.PrefetchScalarGridSpec(
            num_scalar_prefetch=0,
            grid=(grid_b, n_hw),
            in_specs=[
                pl.BlockSpec((block_b, C, block_hw), lambda b, h: (b, 0, h)),
                pl.BlockSpec((C, Ch), lambda b, h: (0, 0)),
                pl.BlockSpec((1, Ch), lambda b, h: (0, 0)),
                pl.BlockSpec((Ch, C), lambda b, h: (0, 0)),
                pl.BlockSpec((1, C), lambda b, h: (0, 0)),
            ],
            out_specs=pl.BlockSpec((block_b, C, 1), lambda b, h: (b, 0, 0)),
            scratch_shapes=[pltpu.VMEM((block_b, C), jnp.float32),
                            pltpu.VMEM((block_b, C), jnp.float32)],
        ),
        compiler_params=pltpu.CompilerParams(
            dimension_semantics=("parallel", "arbitrary"),
            vmem_limit_bytes=vmem_limit),
        cost_estimate=pl.CostEstimate(
            flops=int(2 * B * C * HW + 8 * B * C * Ch),
            transcendentals=int(B * C),
            bytes_accessed=int(B * C * HW * itemsize)),
    )(x, w1, b1, w2, b2)

    out = pl.pallas_call(
        _apply_scale_kernel,
        out_shape=jax.ShapeDtypeStruct((B, C, HW), x.dtype),
        grid_spec=pltpu.PrefetchScalarGridSpec(
            num_scalar_prefetch=0,
            grid=(grid_b, n_hw),
            in_specs=[
                pl.BlockSpec((block_b, C, block_hw), lambda b, h: (b, 0, h)),
                pl.BlockSpec((block_b, C, 1), lambda b, h: (b, 0, 0)),
            ],
            out_specs=pl.BlockSpec((block_b, C, block_hw), lambda b, h: (b, 0, h)),
        ),
        compiler_params=pltpu.CompilerParams(
            dimension_semantics=("parallel", "parallel"),
            vmem_limit_bytes=vmem_limit),
        cost_estimate=pl.CostEstimate(
            flops=int(B * C * HW),
            transcendentals=0,
            bytes_accessed=int(2 * B * C * HW * itemsize)),
    )(x, scale)
    return out


def channel_gate(x_nchw, w1, b1, w2, b2, *, block_b=None, block_hw=None,
                 force_hw_tiling=False):
    """x_nchw: (B, C, H, W) -> (B, C, H, W), CBAM ChannelGate forward."""
    B, C, H, W = x_nchw.shape
    HW = H * W
    Ch = w1.shape[1]
    itemsize = jnp.dtype(x_nchw.dtype).itemsize

    x = x_nchw.reshape(B, C, HW)                 # free reshape of NCHW
    weight_bytes = 4 * (w1.size + b1.size + w2.size + b2.size)
    vmem_cap = _safe_vmem_cap()
    target_step_bytes = 8 * 2**20                # ~4-8 MiB per pipelined step

    # Lane-dense width used by the fused (image-resident) path.
    hw_pad = HW if HW % 128 == 0 else ((HW + 127) // 128) * 128
    image_bytes = C * hw_pad * itemsize
    fused_fits = (4 * image_bytes + weight_bytes + 2 * 2**20) <= vmem_cap

    if force_hw_tiling or not fused_fits:
        out = _channel_gate_hw_tiled(x, w1, b1, w2, b2, B, C, HW, Ch, itemsize,
                                     weight_bytes, vmem_cap, target_step_bytes,
                                     block_hw)
        return out.reshape(B, C, H, W)

    # ---------------- fused path ----------------
    if hw_pad != HW:
        # Pad lanes to a multiple of 128 so stores are unmasked; the kernel
        # masks pad lanes out of the mean/max and the wrapper slices them off.
        x = jnp.pad(x, ((0, 0), (0, 0), (0, hw_pad - HW)))

    if block_b is None:
        bb_bytes = max(1, target_step_bytes // max(image_bytes, 1))
        bb_steps = max(1, B // 8)    # keep >= 8 grid steps (>= 4 per v7x core)
        block_b = int(max(1, min(B, bb_bytes, bb_steps)))
    grid_b = pl.cdiv(B, block_b)     # partial last tile: OOB rows are dropped

    tile_bytes = block_b * image_bytes
    vmem_limit = int(min(vmem_cap,
                         max(16 * 2**20, 4 * tile_bytes + weight_bytes + 2 * 2**20)))

    out = pl.pallas_call(
        functools.partial(_gate_fused_kernel, hw_valid=HW),
        out_shape=jax.ShapeDtypeStruct((B, C, hw_pad), x.dtype),
        grid_spec=pltpu.PrefetchScalarGridSpec(
            num_scalar_prefetch=0,
            grid=(grid_b,),
            in_specs=[
                pl.BlockSpec((block_b, C, hw_pad), lambda b: (b, 0, 0)),  # x
                pl.BlockSpec((C, Ch), lambda b: (0, 0)),                  # w1
                pl.BlockSpec((1, Ch), lambda b: (0, 0)),                  # b1
                pl.BlockSpec((Ch, C), lambda b: (0, 0)),                  # w2
                pl.BlockSpec((1, C), lambda b: (0, 0)),                   # b2
            ],
            out_specs=pl.BlockSpec((block_b, C, hw_pad), lambda b: (b, 0, 0)),
        ),
        compiler_params=pltpu.CompilerParams(
            dimension_semantics=("parallel",),
            vmem_limit_bytes=vmem_limit),
        cost_estimate=pl.CostEstimate(
            flops=int(B * C * (3 * HW + 8 * Ch)),
            transcendentals=int(B * C),
            bytes_accessed=int(2 * B * C * hw_pad * itemsize)),
    )(x, w1, b1, w2, b2)

    if hw_pad != HW:
        out = out[:, :, :HW]
    return out.reshape(B, C, H, W)


def channel_gate_ref(x, w1, b1, w2, b2):
    """Pure-JAX reference matching the PyTorch ChannelGate forward."""
    B, C, H, W = x.shape
    xf = x.reshape(B, C, H * W).astype(jnp.float32)
    avg_pool = jnp.mean(xf, axis=-1)
    max_pool = jnp.max(xf, axis=-1)

    def mlp(p):
        return jnp.maximum(p @ w1 + b1[0], 0.0) @ w2 + b2[0]

    att = mlp(avg_pool) + mlp(max_pool)
    scale = jax.nn.sigmoid(att)[:, :, None, None]
    return x * scale.astype(x.dtype)


# TODO(synk): only the CBAM ChannelGate forward is implemented as a Pallas
# kernel; the surrounding ResNet-101 conv stack, LSTM and Linear heads of Net
# are out of scope for this kernel.

if __name__ == "__main__":
    # gate_channels=64, reduction_ratio=16 -> hidden = 4
    B, C, H, W = 2, 64, 16, 16
    Ch = C // 16

    key = jax.random.PRNGKey(0)
    kx, k1, k2, k3, k4, kx2 = jax.random.split(key, 6)

    x = jax.random.normal(kx, (B, C, H, W), dtype=jnp.float32)
    # Deterministic synthetic parameters (nn.Linear shapes, stored as (in, out))
    w1 = jax.random.normal(k1, (C, Ch), dtype=jnp.float32) * 0.1
    b1 = jax.random.normal(k2, (1, Ch), dtype=jnp.float32) * 0.1
    w2 = jax.random.normal(k3, (Ch, C), dtype=jnp.float32) * 0.1
    b2 = jax.random.normal(k4, (1, C), dtype=jnp.float32) * 0.1

    ref = channel_gate_ref(x, w1, b1, w2, b2)

    # 1) Fused (image-resident) path.
    out = jax.block_until_ready(channel_gate(x, w1, b1, w2, b2))
    assert out.shape == (B, C, H, W)
    assert jnp.allclose(out, ref, atol=1e-5, rtol=1e-5), "fused path mismatch"

    # 2) HW-tiled fallback path (used when a single image exceeds VMEM).
    out_hw = jax.block_until_ready(
        channel_gate(x, w1, b1, w2, b2, force_hw_tiling=True, block_hw=128))
    assert jnp.allclose(out_hw, ref, atol=1e-5, rtol=1e-5), "hw-tiled path mismatch"

    # 3) Non-128-multiple spatial size (HW=196) exercises pad + lane masking.
    x2 = jax.random.normal(kx2, (3, C, 14, 14), dtype=jnp.float32)
    ref2 = channel_gate_ref(x2, w1, b1, w2, b2)
    out2 = jax.block_until_ready(channel_gate(x2, w1, b1, w2, b2))
    assert jnp.allclose(out2, ref2, atol=1e-5, rtol=1e-5), "padded path mismatch"

    print("KERNEL_OK")
</pallas_src>

<mosaic_0001>
module attributes {stable_mosaic.version = 11 : i64} {
  func.func @_gate_fused_kernel(%arg0: i32, %arg1: memref<1x64x256xf32, #tpu.memory_space<vmem>>, %arg2: memref<64x4xf32, #tpu.memory_space<vmem>>, %arg3: memref<1x4xf32, #tpu.memory_space<vmem>>, %arg4: memref<4x64xf32, #tpu.memory_space<vmem>>, %arg5: memref<1x64xf32, #tpu.memory_space<vmem>>, %arg6: memref<1x64x256xf32, #tpu.memory_space<vmem>>) attributes {dimension_semantics = [#tpu.dimension_semantics<parallel>], iteration_bounds = array<i64: 2>, scalar_prefetch = 0 : i64, scratch_operands = 0 : i64, tpu.core_type = #tpu.core_type<tc>, window_params = [{transform_indices = @transform_0, window_bounds = array<i64: 1, 64, 256>}, {pipeline_mode = #tpu.pipeline_mode<synchronous>, transform_indices = @transform_1, window_bounds = array<i64: 64, 4>}, {pipeline_mode = #tpu.pipeline_mode<synchronous>, transform_indices = @transform_2, window_bounds = array<i64: 1, 4>}, {pipeline_mode = #tpu.pipeline_mode<synchronous>, transform_indices = @transform_3, window_bounds = array<i64: 4, 64>}, {pipeline_mode = #tpu.pipeline_mode<synchronous>, transform_indices = @transform_4, window_bounds = array<i64: 1, 64>}, {transform_indices = @transform_5, window_bounds = array<i64: 1, 64, 256>}]} {
    %c0 = arith.constant 0 : index
    %c0_0 = arith.constant 0 : index
    %c0_1 = arith.constant 0 : index
    %0 = vector.load %arg1[%c0, %c0_0, %c0_1] : memref<1x64x256xf32, #tpu.memory_space<vmem>>, vector<1x64x256xf32>
    %cst = arith.constant dense<0.000000e+00> : vector<1x64xf32>
    %1 = vector.multi_reduction <add>, %0, %cst [2] : vector<1x64x256xf32> to vector<1x64xf32>
    %cst_2 = arith.constant dense<0xFF800000> : vector<1x64xf32>
    %2 = vector.multi_reduction <maximumf>, %0, %cst_2 [2] : vector<1x64x256xf32> to vector<1x64xf32>
    %cst_3 = arith.constant 3.906250e-03 : f32
    %3 = vector.broadcast %cst_3 : f32 to vector<1x64xf32>
    %4 = arith.mulf %1, %3 : vector<1x64xf32>
    %c0_4 = arith.constant 0 : index
    %c0_5 = arith.constant 0 : index
    %5 = vector.load %arg2[%c0_4, %c0_5] : memref<64x4xf32, #tpu.memory_space<vmem>>, vector<64x4xf32>
    %c0_6 = arith.constant 0 : index
    %c0_7 = arith.constant 0 : index
    %6 = vector.load %arg3[%c0_6, %c0_7] : memref<1x4xf32, #tpu.memory_space<vmem>>, vector<1x4xf32>
    %c0_8 = arith.constant 0 : index
    %c0_9 = arith.constant 0 : index
    %7 = vector.load %arg4[%c0_8, %c0_9] : memref<4x64xf32, #tpu.memory_space<vmem>>, vector<4x64xf32>
    %c0_10 = arith.constant 0 : index
    %c0_11 = arith.constant 0 : index
    %8 = vector.load %arg5[%c0_10, %c0_11] : memref<1x64xf32, #tpu.memory_space<vmem>>, vector<1x64xf32>
    %cst_12 = arith.constant dense<0.000000e+00> : vector<1x4xf32>
    %9 = tpu.matmul %4, %5, %cst_12 {dimension_numbers = #tpu.dot_dimension_numbers<[1], [0], [0], [1], [0, 0, 1, 1], [], []>} : vector<1x64xf32>, vector<64x4xf32>, vector<1x4xf32> -> vector<1x4xf32>
    %10 = arith.addf %9, %6 : vector<1x4xf32>
    %cst_13 = arith.constant 0.000000e+00 : f32
    %11 = vector.broadcast %cst_13 : f32 to vector<1x4xf32>
    %12 = arith.maximumf %10, %11 : vector<1x4xf32>
    %cst_14 = arith.constant dense<0.000000e+00> : vector<1x64xf32>
    %13 = tpu.matmul %12, %7, %cst_14 {dimension_numbers = #tpu.dot_dimension_numbers<[1], [0], [0], [1], [0, 0, 1, 1], [], []>} : vector<1x4xf32>, vector<4x64xf32>, vector<1x64xf32> -> vector<1x64xf32>
    %14 = arith.addf %13, %8 : vector<1x64xf32>
    %cst_15 = arith.constant dense<0.000000e+00> : vector<1x4xf32>
    %15 = tpu.matmul %2, %5, %cst_15 {dimension_numbers = #tpu.dot_dimension_numbers<[1], [0], [0], [1], [0, 0, 1, 1], [], []>} : vector<1x64xf32>, vector<64x4xf32>, vector<1x4xf32> -> vector<1x4xf32>
    %16 = arith.addf %15, %6 : vector<1x4xf32>
    %cst_16 = arith.constant 0.000000e+00 : f32
    %17 = vector.broadcast %cst_16 : f32 to vector<1x4xf32>
    %18 = arith.maximumf %16, %17 : vector<1x4xf32>
    %cst_17 = arith.constant dense<0.000000e+00> : vector<1x64xf32>
    %19 = tpu.matmul %18, %7, %cst_17 {dimension_numbers = #tpu.dot_dimension_numbers<[1], [0], [0], [1], [0, 0, 1, 1], [], []>} : vector<1x4xf32>, vector<4x64xf32>, vector<1x64xf32> -> vector<1x64xf32>
    %20 = arith.addf %19, %8 : vector<1x64xf32>
    %21 = arith.addf %14, %20 : vector<1x64xf32>
    %22 = arith.negf %21 : vector<1x64xf32>
    %23 = math.exp %22 : vector<1x64xf32>
    %cst_18 = arith.constant 1.000000e+00 : f32
    %24 = vector.broadcast %cst_18 : f32 to vector<1x64xf32>
    %25 = arith.addf %24, %23 : vector<1x64xf32>
    %26 = arith.divf %24, %25 : vector<1x64xf32>
    %27 = vector.shape_cast %26 : vector<1x64xf32> to vector<1x64x1xf32>
    %28 = vector.broadcast %27 : vector<1x64x1xf32> to vector<1x64x256xf32>
    %29 = arith.mulf %0, %28 : vector<1x64x256xf32>
    %c0_19 = arith.constant 0 : index
    %c0_20 = arith.constant 0 : index
    %c0_21 = arith.constant 0 : index
    %30 = vector.load %arg6[%c0_19, %c0_20, %c0_21] : memref<1x64x256xf32, #tpu.memory_space<vmem>>, vector<1x64x256xf32>
    tpu.vector_store %arg6[%c0_19, %c0_20, %c0_21], %29 {strides = array<i32>} : memref<1x64x256xf32, #tpu.memory_space<vmem>>, vector<1x64x256xf32>,
    return
  }
  func.func @transform_0(%arg0: i32) -> (i32, i32, i32) {
    %c0_i32 = arith.constant 0 : i32
    %c0_i32_0 = arith.constant 0 : i32
    %c0_i32_1 = arith.constant 0 : i32
    return %arg0, %c0_i32, %c0_i32_0 : i32, i32, i32
  }
  func.func @transform_1(%arg0: i32) -> (i32, i32) {
    %c0_i32 = arith.constant 0 : i32
    %c0_i32_0 = arith.constant 0 : i32
    %c0_i32_1 = arith.constant 0 : i32
    return %c0_i32, %c0_i32_0 : i32, i32
  }
  func.func @transform_2(%arg0: i32) -> (i32, i32) {
    %c0_i32 = arith.constant 0 : i32
    %c0_i32_0 = arith.constant 0 : i32
    %c0_i32_1 = arith.constant 0 : i32
    return %c0_i32, %c0_i32_0 : i32, i32
  }
  func.func @transform_3(%arg0: i32) -> (i32, i32) {
    %c0_i32 = arith.constant 0 : i32
    %c0_i32_0 = arith.constant 0 : i32
    %c0_i32_1 = arith.constant 0 : i32
    return %c0_i32, %c0_i32_0 : i32, i32
  }
  func.func @transform_4(%arg0: i32) -> (i32, i32) {
    %c0_i32 = arith.constant 0 : i32
    %c0_i32_0 = arith.constant 0 : i32
    %c0_i32_1 = arith.constant 0 : i32
    return %c0_i32, %c0_i32_0 : i32, i32
  }
  func.func @transform_5(%arg0: i32) -> (i32, i32, i32) {
    %c0_i32 = arith.constant 0 : i32
    %c0_i32_0 = arith.constant 0 : i32
    %c0_i32_1 = arith.constant 0 : i32
    return %arg0, %c0_i32, %c0_i32_0 : i32, i32, i32
  }
}

</mosaic_0001>

<llo_original>
// kernel: tpu_custom_call.1
$region0: #{tpu_custom_call.1}
  #allocation0 [shape = 'u32[]', space=smem, size = 0x4, offset = 0x4, fixed_abs, tag = 'smem constant byte address 0x4 - core index']
  #allocation1 [shape = 'u32[144,128]{1,0:T(1,128)}', space=vmem, size = 0x12000, scoped, tag = 'internal scratch']
  %s0 = inlined_call_operand.hbm [shape: f32[2,64,256], index: 0, kind: input, shape index: {}]
  %s1 = inlined_call_operand.vmem [shape: f32[64,4], index: 1, kind: input, shape index: {}]
  %s2 = inlined_call_operand.vmem [shape: f32[1,4], index: 2, kind: input, shape index: {}]
  %s3 = inlined_call_operand.vmem [shape: f32[4,64], index: 3, kind: input, shape index: {}]
  %s4 = inlined_call_operand.vmem [shape: f32[1,64], index: 4, kind: input, shape index: {}]
  %s5 = inlined_call_operand.hbm [shape: f32[2,64,256], index: 5, kind: output, shape index: {}]
  %s6 = sld [smem:[#allocation0]]
  $region57: #{tpu_custom_call.1} parent=0
    _
  %s8 = ssub.s32 1, %s6
  %s9 = scalar_select 0, %s8, %s6
  $region1: #{tpu_custom_call.1} parent=0
    #allocation2 [shape = 'u8[131072]{0}', space=vmem, size = 0x20000, scoped, tag = 'input window, operand 0']
    #allocation3 [shape = 's32[2]{0}', space=sflag, size = 0x8, scoped, tag = 'scoped memory for tpu_custom_call.1']
    #allocation4 [shape = 's32[2]{0}', space=sflag, size = 0x8, scoped, tag = 'scoped memory for tpu_custom_call.1']
    #allocation5 [shape = 'u8[131072]{0}', space=vmem, size = 0x20000, scoped, tag = 'output window, operand 0']
    %10 = vsyncpa [#allocation3], 0
    %s11 = scalar_lea.sflag [#allocation3], 1
    %12 = vsyncpa %s11, 0
    %13 = vsyncpa [#allocation4], 0
    %s14 = scalar_lea.sflag [#allocation4], 1
    %15 = vsyncpa %s14, 0
    loop: start=0, step=1, limit=4
    $region2: #{tpu_custom_call.1} parent=1 // loop_pre_header
      _
    $region3: #{tpu_custom_call.1} parent=1 // loop_header
      %s17 = sphi 0, %s21
      %p18 = scmp.ge.s32.totalorder %s17, 4
      %s27 = sphi 0, %s29
      %s30 = sphi 0, %s27
      %s31 = sphi 0, %s30
      %s47 = sphi 0, %s31
      %s51 = sphi 0, %s51
      %s53 = sphi 0, %s51
      %s54 = sphi 0, %s53
      %s68 = sphi 0, %s54
      %s72 = sphi 0, %s72
      %s74 = sphi 0, %s72
      %s75 = sphi 0, %s74
      %s89 = sphi 0, %s75
      %s93 = sphi 0, %s93
      %s95 = sphi 0, %s93
      %s96 = sphi 0, %s95
      %s110 = sphi 0, %s96
      %s114 = sphi 0, %s114
      %s116 = sphi 0, %s114
      %s117 = sphi 0, %s116
      %s131 = sphi 0, %s117
      %s137 = sphi 0, %s139
      %s140 = sphi 0, %s137
      %s141 = sphi 0, %s140
      %s157 = sphi 0, %s141
    $region4: #{tpu_custom_call.1} parent=1 // loop_header_branch
      %20 = sbr.rel (%p18) target = $region8
    $region5: #{tpu_custom_call.1} parent=1 // loop_body
      %s22 = ssub.s32 %s17, 1
      %s23 = ssub.s32 %s17, 2
      %s24 = sadd.s32 %s17, 1
      %s25 = ssub.s32 %s17, %s24
      %p26 = scmp.eq.s32.totalorder %s25, 0
      %s28 = sadd.s32 %s27, 1
      %s29 = scalar_select %p26, %s27, %s28
      %p32 = pneg %p26
      %p33 = scmp.eq.s32.totalorder %s17, 1
      %p34 = por %p32, %p33
      %p35 = scmp.ne.s32.totalorder %s27, %s30
      %p36 = scmp.eq.s32.totalorder %s17, 0
      %p37 = por %p35, %p36
      %p38 = scmp.ne.s32.totalorder %s27, %s30
      %p39 = scmp.eq.s32.totalorder %s22, 1
      %p40 = por %p38, %p39
      %p41 = scmp.ne.s32.totalorder %s30, %s31
      %p42 = scmp.eq.s32.totalorder %s22, 0
      %p43 = por %p41, %p42
      %p44 = scmp.ne.s32.totalorder %s30, %s31
      %p45 = scmp.eq.s32.totalorder %s23, 1
      %p46 = por %p44, %p45
      %p48 = scmp.ne.s32.totalorder %s31, %s47
      %p49 = scmp.eq.s32.totalorder %s23, 0
      %p50 = por %p48, %p49
      %s52 = sadd.s32 %s51, 1
      %p55 = scmp.eq.s32.totalorder %s17, 1
      %p56 = scmp.ne.s32.totalorder %s51, %s53
      %p57 = scmp.eq.s32.totalorder %s17, 0
      %p58 = por %p56, %p57
      %p59 = scmp.ne.s32.totalorder %s51, %s53
      %p60 = scmp.eq.s32.totalorder %s22, 1
      %p61 = por %p59, %p60
      %p62 = scmp.ne.s32.totalorder %s53, %s54
      %p63 = scmp.eq.s32.totalorder %s22, 0
      %p64 = por %p62, %p63
      %p65 = scmp.ne.s32.totalorder %s53, %s54
      %p66 = scmp.eq.s32.totalorder %s23, 1
      %p67 = por %p65, %p66
      %p69 = scmp.ne.s32.totalorder %s54, %s68
      %p70 = scmp.eq.s32.totalorder %s23, 0
      %p71 = por %p69, %p70
      %s73 = sadd.s32 %s72, 1
      %p76 = scmp.eq.s32.totalorder %s17, 1
      %p77 = scmp.ne.s32.totalorder %s72, %s74
      %p78 = scmp.eq.s32.totalorder %s17, 0
      %p79 = por %p77, %p78
      %p80 = scmp.ne.s32.totalorder %s72, %s74
      %p81 = scmp.eq.s32.totalorder %s22, 1
      %p82 = por %p80, %p81
      %p83 = scmp.ne.s32.totalorder %s74, %s75
      %p84 = scmp.eq.s32.totalorder %s22, 0
      %p85 = por %p83, %p84
      %p86 = scmp.ne.s32.totalorder %s74, %s75
      %p87 = scmp.eq.s32.totalorder %s23, 1
      %p88 = por %p86, %p87
      %p90 = scmp.ne.s32.totalorder %s75, %s89
      %p91 = scmp.eq.s32.totalorder %s23, 0
      %p92 = por %p90, %p91
      %s94 = sadd.s32 %s93, 1
      %p97 = scmp.eq.s32.totalorder %s17, 1
      %p98 = scmp.ne.s32.totalorder %s93, %s95
      %p99 = scmp.eq.s32.totalorder %s17, 0
      %p100 = por %p98, %p99
      %p101 = scmp.ne.s32.totalorder %s93, %s95
      %p102 = scmp.eq.s32.totalorder %s22, 1
      %p103 = por %p101, %p102
      %p104 = scmp.ne.s32.totalorder %s95, %s96
      %p105 = scmp.eq.s32.totalorder %s22, 0
      %p106 = por %p104, %p105
      %p107 = scmp.ne.s32.totalorder %s95, %s96
      %p108 = scmp.eq.s32.totalorder %s23, 1
      %p109 = por %p107, %p108
      %p111 = scmp.ne.s32.totalorder %s96, %s110
      %p112 = scmp.eq.s32.totalorder %s23, 0
      %p113 = por %p111, %p112
      %s115 = sadd.s32 %s114, 1
      %p118 = scmp.eq.s32.totalorder %s17, 1
      %p119 = scmp.ne.s32.totalorder %s114, %s116
      %p120 = scmp.eq.s32.totalorder %s17, 0
      %p121 = por %p119, %p120
      %p122 = scmp.ne.s32.totalorder %s114, %s116
      %p123 = scmp.eq.s32.totalorder %s22, 1
      %p124 = por %p122, %p123
      %p125 = scmp.ne.s32.totalorder %s116, %s117
      %p126 = scmp.eq.s32.totalorder %s22, 0
      %p127 = por %p125, %p126
      %p128 = scmp.ne.s32.totalorder %s116, %s117
      %p129 = scmp.eq.s32.totalorder %s23, 1
      %p130 = por %p128, %p129
      %p132 = scmp.ne.s32.totalorder %s117, %s131
      %p133 = scmp.eq.s32.totalorder %s23, 0
      %p134 = por %p132, %p133
      %s135 = ssub.s32 %s17, %s24
      %p136 = scmp.eq.s32.totalorder %s135, 0
      %s138 = sadd.s32 %s137, 1
      %s139 = scalar_select %p136, %s137, %s138
      %p142 = pneg %p136
      %p143 = scmp.eq.s32.totalorder %s17, 1
      %p144 = por %p142, %p143
      %p145 = scmp.ne.s32.totalorder %s137, %s140
      %p146 = scmp.eq.s32.totalorder %s17, 0
      %p147 = por %p145, %p146
      %p148 = scmp.ne.s32.totalorder %s137, %s140
      %p149 = scmp.eq.s32.totalorder %s22, 1
      %p150 = por %p148, %p149
      %p151 = scmp.ne.s32.totalorder %s140, %s141
      %p152 = scmp.eq.s32.totalorder %s22, 0
      %p153 = por %p151, %p152
      %p154 = scmp.ne.s32.totalorder %s140, %s141
      %p155 = scmp.eq.s32.totalorder %s23, 1
      %p156 = por %p154, %p155
      %p158 = scmp.ne.s32.totalorder %s141, %s157
      %p159 = scmp.eq.s32.totalorder %s23, 0
      %p160 = por %p158, %p159
      %p161 = scmp.le.s32.totalorder 1, %s17
      %p162 = scmp.lt.s32.totalorder %s17, 3
      %p163 = pnand %p161, %p162
      %p164 = pneg %p163
      // Predicated region
      $region9: #{tpu_custom_call.1} parent=5 // pred_check
        _
      $region10: #{tpu_custom_call.1} parent=5 // pred_check_branch
        %166 = sbr.rel (%p163) target = $region12
      $region11: #{tpu_custom_call.1} parent=5 // pred_region
        %s167 = ssub.s32 %s17, 1
        // Predicated region
        $region13: #{tpu_custom_call.1} parent=11 // pred_check
          %p168 = pneg %p64
        $region14: #{tpu_custom_call.1} parent=11 // pred_check_branch
          %170 = sbr.rel (%p168) target = $region16
        $region15: #{tpu_custom_call.1} parent=11 // pred_region
          _
        $region16: #{tpu_custom_call.1} parent=11 // pred_fallthru
          _
        // Predicated region
        $region17: #{tpu_custom_call.1} parent=11 // pred_check
          %p171 = pneg %p85
        $region18: #{tpu_custom_call.1} parent=11 // pred_check_branch
          %173 = sbr.rel (%p171) target = $region20
        $region19: #{tpu_custom_call.1} parent=11 // pred_region
          _
        $region20: #{tpu_custom_call.1} parent=11 // pred_fallthru
          _
        // Predicated region
        $region21: #{tpu_custom_call.1} parent=11 // pred_check
          %p174 = pneg %p106
        $region22: #{tpu_custom_call.1} parent=11 // pred_check_branch
          %176 = sbr.rel (%p174) target = $region24
        $region23: #{tpu_custom_call.1} parent=11 // pred_region
          _
        $region24: #{tpu_custom_call.1} parent=11 // pred_fallthru
          _
        // Predicated region
        $region25: #{tpu_custom_call.1} parent=11 // pred_check
          %p177 = pneg %p127
        $region26: #{tpu_custom_call.1} parent=11 // pred_check_branch
          %179 = sbr.rel (%p177) target = $region28
        $region27: #{tpu_custom_call.1} parent=11 // pred_region
          _
        $region28: #{tpu_custom_call.1} parent=11 // pred_fallthru
          _
      $region12: #{tpu_custom_call.1} parent=5 // pred_fallthru
        _
      %p180 = scmp.lt.s32.totalorder %s17, 2
      // Predicated region
      $region29: #{tpu_custom_call.1} parent=5 // pred_check
        %p181 = pneg %p180
      $region30: #{tpu_custom_call.1} parent=5 // pred_check_branch
        %183 = sbr.rel (%p181) target = $region32
      $region31: #{tpu_custom_call.1} parent=5 // pred_region
        // Predicated region
        $region33: #{tpu_custom_call.1} parent=31 // pred_check
          %p184 = pneg %p37
        $region34: #{tpu_custom_call.1} parent=31 // pred_check_branch
          %186 = sbr.rel (%p184) target = $region36
        $region35: #{tpu_custom_call.1} parent=31 // pred_region
          %s187 = sand.u32 %s27, 1
          %s188 = scalar_lea.sflag [#allocation3], %s187
          %s189 = sand.u32 %s27, 1
          %s190 = smul.addr %s189, 128
          %s191 = scalar_lea.vmem [#allocation2], %s190
          %s193 = ssub.s32 2048, 2048
          %194 = vsyncadd %s188, %s193
          %s195 = smul.addr %s17, 16
          %s196 = smul.addr %s195, 128
          %s197 = scalar_lea.hbm %s0, %s196
          %s198 = sshll.u32 %s191, 4
          %s199 = int_to_ptr.vmem [resolvable:$true] %s198
          %204 = dma.hbm_to_vmem [thread:$0]  %s197, 2048, %s199, %s188, 256, 256, 16
        $region36: #{tpu_custom_call.1} parent=31 // pred_fallthru
          _
      $region32: #{tpu_custom_call.1} parent=5 // pred_fallthru
        _
      %p205 = scmp.le.s32.totalorder 1, %s17
      %p206 = scmp.lt.s32.totalorder %s17, 3
      %p207 = pnand %p205, %p206
      %p208 = pneg %p207
      // Predicated region
      $region37: #{tpu_custom_call.1} parent=5 // pred_check
        _
      $region38: #{tpu_custom_call.1} parent=5 // pred_check_branch
        %210 = sbr.rel (%p207) target = $region40
      $region39: #{tpu_custom_call.1} parent=5 // pred_region
        %s211 = ssub.s32 %s17, 1
        %s212 = sand.u32 %s30, 1
        %s213 = scalar_lea.sflag [#allocation3], %s212
        %s214 = sand.u32 %s30, 1
        %s215 = smul.addr %s214, 128
        %s216 = scalar_lea.vmem [#allocation2], %s215
        // Predicated region
        $region41: #{tpu_custom_call.1} parent=39 // pred_check
          %p217 = pneg %p43
        $region42: #{tpu_custom_call.1} parent=39 // pred_check_branch
          %219 = sbr.rel (%p217) target = $region44
        $region43: #{tpu_custom_call.1} parent=39 // pred_region
          %220 = dma.done %s213, 2048
        $region44: #{tpu_custom_call.1} parent=39 // pred_fallthru
          _
        %s221 = sand.u32 %s30, 1
        %s222 = scalar_lea.sflag [#allocation3], %s221
        %s223 = sand.u32 %s30, 1
        %s224 = smul.addr %s223, 128
        %s225 = scalar_lea.vmem [#allocation2], %s224
        %p226 = pneg %p43
        %p227 = pneg %p40
        %p228 = pneg %p64
        %p229 = pneg %p61
        %p230 = pneg %p85
        %p231 = pneg %p82
        %p232 = pneg %p106
        %p233 = pneg %p103
        %p234 = pneg %p127
        %p235 = pneg %p124
        %p236 = pneg %p153
        %p237 = pneg %p150
        %s238 = sand.u32 %s140, 1
        %s239 = scalar_lea.sflag [#allocation4], %s238
        %s240 = sand.u32 %s140, 1
        %s241 = smul.addr %s240, 128
        %s242 = scalar_lea.vmem [#allocation5], %s241
        %v243 = vld [vmem:[%s216] sm:$0xff]
        %v244 = vld [vmem:[%s216 + $0x8] sm:$0xff]
        %v245 = vld [vmem:[%s216 + $0x10] sm:$0xff]
        %v246 = vld [vmem:[%s216 + $0x18] sm:$0xff]
        %v247 = vld [vmem:[%s216 + $0x20] sm:$0xff]
        %v248 = vld [vmem:[%s216 + $0x28] sm:$0xff]
        %v249 = vld [vmem:[%s216 + $0x30] sm:$0xff]
        %v250 = vld [vmem:[%s216 + $0x38] sm:$0xff]
        %v251 = vld [vmem:[%s216 + $0x40] sm:$0xff]
        %v252 = vld [vmem:[%s216 + $0x48] sm:$0xff]
        %v253 = vld [vmem:[%s216 + $0x50] sm:$0xff]
        %v254 = vld [vmem:[%s216 + $0x58] sm:$0xff]
        %v255 = vld [vmem:[%s216 + $0x60] sm:$0xff]
        %v256 = vld [vmem:[%s216 + $0x68] sm:$0xff]
        %v257 = vld [vmem:[%s216 + $0x70] sm:$0xff]
        %v258 = vld [vmem:[%s216 + $0x78] sm:$0xff]
        %v259 = vadd.f32 %v243, %v244
        %260 = vadd.xlane.f32.xlu0 %v259
        %v261 = vpop.xlane.xlu0 %260
        %v262 = vadd.f32 %v245, %v246
        %263 = vadd.xlane.f32.xlu0 %v262
        %v264 = vpop.xlane.xlu0 %263
        %v265 = vadd.f32 %v247, %v248
        %266 = vadd.xlane.f32.xlu0 %v265
        %v267 = vpop.xlane.xlu0 %266
        %v268 = vadd.f32 %v249, %v250
        %269 = vadd.xlane.f32.xlu0 %v268
        %v270 = vpop.xlane.xlu0 %269
        %v271 = vadd.f32 %v251, %v252
        %272 = vadd.xlane.f32.xlu0 %v271
        %v273 = vpop.xlane.xlu0 %272
        %v274 = vadd.f32 %v253, %v254
        %275 = vadd.xlane.f32.xlu0 %v274
        %v276 = vpop.xlane.xlu0 %275
        %v277 = vadd.f32 %v255, %v256
        %278 = vadd.xlane.f32.xlu0 %v277
        %v279 = vpop.xlane.xlu0 %278
        %v280 = vadd.f32 %v257, %v258
        %281 = vadd.xlane.f32.xlu0 %v280
        %v282 = vpop.xlane.xlu0 %281
        %v283 = vmax.f32 %v243, %v244
        %284 = vmax.xlane.f32.xlu0 %v283
        %v285 = vpop.xlane.xlu0 %284
        %v286 = vmax.f32 %v245, %v246
        %287 = vmax.xlane.f32.xlu0 %v286
        %v288 = vpop.xlane.xlu0 %287
        %v289 = vmax.f32 %v247, %v248
        %290 = vmax.xlane.f32.xlu0 %v289
        %v291 = vpop.xlane.xlu0 %290
        %v292 = vmax.f32 %v249, %v250
        %293 = vmax.xlane.f32.xlu0 %v292
        %v294 = vpop.xlane.xlu0 %293
        %v295 = vmax.f32 %v251, %v252
        %296 = vmax.xlane.f32.xlu0 %v295
        %v297 = vpop.xlane.xlu0 %296
        %v298 = vmax.f32 %v253, %v254
        %299 = vmax.xlane.f32.xlu0 %v298
        %v300 = vpop.xlane.xlu0 %299
        %v301 = vmax.f32 %v255, %v256
        %302 = vmax.xlane.f32.xlu0 %v301
        %v303 = vpop.xlane.xlu0 %302
        %v304 = vmax.f32 %v257, %v258
        %305 = vmax.xlane.f32.xlu0 %v304
        %v306 = vpop.xlane.xlu0 %305
        %v307 = vmul.f32 %v261, 0.00390625
        %v308 = vmul.f32 %v264, 0.00390625
        %v309 = vmul.f32 %v267, 0.00390625
        %v310 = vmul.f32 %v270, 0.00390625
        %v311 = vmul.f32 %v273, 0.00390625
        %v312 = vmul.f32 %v276, 0.00390625
        %v313 = vmul.f32 %v279, 0.00390625
        %v314 = vmul.f32 %v282, 0.00390625
        %v315 = vld [vmem:[%s1] sm:$0xff]
        %v316 = vld [vmem:[%s1 + $0x8] sm:$0xff]
        %v317 = vld [vmem:[%s1 + $0x10] sm:$0xff]
        %v318 = vld [vmem:[%s1 + $0x18] sm:$0xff]
        %v319 = vld [vmem:[%s1 + $0x20] sm:$0xff]
        %v320 = vld [vmem:[%s1 + $0x28] sm:$0xff]
        %v321 = vld [vmem:[%s1 + $0x30] sm:$0xff]
        %v322 = vld [vmem:[%s1 + $0x38] sm:$0xff]
        %v323 = vld [vmem:[%s2] sm:$0x1]
        %v324 = vld [vmem:[%s3] sm:$0xf]
        %v325 = vld [vmem:[%s4] sm:$0x1]
        %v334 = vlaneseq
        %v335 = vand.u32 %v334, 127
        %v336 = vlaneseq
        %v337 = vshrl.u32 %v336, 7
        %v338 = vsub.s32 %v335, %v337
        %v339 = vrot.slane %v307, %v338
        %v340 = vadd.s32 %v335, 4294967288
        %v341 = vlaneseq
        %v342 = vshrl.u32 %v341, 7
        %v343 = vsub.s32 %v340, %v342
        %v344 = vrot.slane %v308, %v343
        %vm345 = vcmask 130112
        %v346 = vsel %vm345, %v344, %v339
        %v347 = vadd.s32 %v335, 4294967280
        %v348 = vlaneseq
        %v349 = vshrl.u32 %v348, 7
        %v350 = vsub.s32 %v347, %v349
        %v351 = vrot.slane %v309, %v350
        %vm352 = vcmask 195712
        %v353 = vsel %vm352, %v351, %v346
        %v354 = vadd.s32 %v335, 4294967272
        %v355 = vlaneseq
        %v356 = vshrl.u32 %v355, 7
        %v357 = vsub.s32 %v354, %v356
        %v358 = vrot.slane %v310, %v357
        %vm359 = vcmask 261312
        %v360 = vsel %vm359, %v358, %v353
        %v361 = vadd.s32 %v335, 4294967264
        %v362 = vlaneseq
        %v363 = vshrl.u32 %v362, 7
        %v364 = vsub.s32 %v361, %v363
        %v365 = vrot.slane %v311, %v364
        %vm366 = vcmask 326912
        %v367 = vsel %vm366, %v365, %v360
        %v368 = vadd.s32 %v335, 4294967256
        %v369 = vlaneseq
        %v370 = vshrl.u32 %v369, 7
        %v371 = vsub.s32 %v368, %v370
        %v372 = vrot.slane %v312, %v371
        %vm373 = vcmask 392512
        %v374 = vsel %vm373, %v372, %v367
        %v375 = vadd.s32 %v335, 4294967248
        %v376 = vlaneseq
        %v377 = vshrl.u32 %v376, 7
        %v378 = vsub.s32 %v375, %v377
        %v379 = vrot.slane %v313, %v378
        %vm380 = vcmask 458112
        %v381 = vsel %vm380, %v379, %v374
        %v382 = vadd.s32 %v335, 4294967240
        %v383 = vlaneseq
        %v384 = vshrl.u32 %v383, 7
        %v385 = vsub.s32 %v382, %v384
        %v386 = vrot.slane %v314, %v385
        %vm387 = vcmask 523712
        %v388 = vsel %vm387, %v386, %v381
        %vm389 = vcmask 523264
        %v390 = vsel %vm389, %v388, 0
        %392 = vmatprep.subr.mxu0 0.0
        %393 = vmatpush1.msra.mxu0 %v315
        %394 = vmatprep.subr.mxu0 0.0
        %395 = vmatpush1.msra.mxu0 %v316
        %396 = vmatprep.subr.mxu0 0.0
        %397 = vmatpush1.msra.mxu0 %v317
        %398 = vmatprep.subr.mxu0 0.0
        %399 = vmatpush1.msra.mxu0 %v318
        %400 = vmatprep.subr.mxu0 0.0
        %401 = vmatpush1.msra.mxu0 %v319
        %402 = vmatprep.subr.mxu0 0.0
        %403 = vmatpush1.msra.mxu0 %v320
        %404 = vmatprep.subr.mxu0 0.0
        %405 = vmatpush1.msra.mxu0 %v321
        %406 = vmatprep.subr.mxu0 0.0
        %407 = vmatpush1.msra.mxu0 %v322
        %408 = vmatprep.subr.mxu0 0.0
        %409 = vmatpush1.msra.mxu0 0.0
        %410 = vmatprep.subr.mxu0 0.0
        %411 = vmatpush1.msra.mxu0 0.0
        %412 = vmatprep.subr.mxu0 0.0
        %413 = vmatpush1.msra.mxu0 0.0
        %414 = vmatprep.subr.mxu0 0.0
        %415 = vmatpush1.msra.mxu0 0.0
        %416 = vmatprep.subr.mxu0 0.0
        %417 = vmatpush1.msra.mxu0 0.0
        %418 = vmatprep.subr.mxu0 0.0
        %419 = vmatpush1.msra.mxu0 0.0
        %420 = vmatprep.subr.mxu0 0.0
        %421 = vmatpush1.msra.mxu0 0.0
        %422 = vmatprep.subr.mxu0 0.0
        %423 = vmatpush1.msra.mxu0 0.0
        %424 = vmatprep.subr.mxu0 0.0
        %425 = vmatpush1.msra.mxu0 0.0
        %426 = vmatprep.subr.mxu0 0.0
        %427 = vmatpush1.msra.mxu0 0.0
        %428 = vmatprep.subr.mxu0 0.0
        %429 = vmatpush1.msra.mxu0 0.0
        %430 = vmatprep.subr.mxu0 0.0
        %431 = vmatpush1.msra.mxu0 0.0
        %432 = vmatprep.subr.mxu0 0.0
        %433 = vmatpush1.msra.mxu0 0.0
        %434 = vmatprep.subr.mxu0 0.0
        %435 = vmatpush1.msra.mxu0 0.0
        %436 = vmatprep.subr.mxu0 0.0
        %437 = vmatpush1.msra.mxu0 0.0
        %438 = vmatprep.subr.mxu0 0.0
        %439 = vmatpush1.msra.mxu0 0.0
        %440 = vmatprep.subr.mxu0 0.0
        %441 = vmatpush1.msra.mxu0 0.0
        %442 = vmatprep.subr.mxu0 0.0
        %443 = vmatpush1.msra.mxu0 0.0
        %444 = vmatprep.subr.mxu0 0.0
        %445 = vmatpush1.msra.mxu0 0.0
        %446 = vmatprep.subr.mxu0 0.0
        %447 = vmatpush1.msra.mxu0 0.0
        %448 = vmatprep.subr.mxu0 0.0
        %449 = vmatpush1.msra.mxu0 0.0
        %450 = vmatprep.subr.mxu0 0.0
        %451 = vmatpush1.msra.mxu0 0.0
        %452 = vmatprep.subr.mxu0 0.0
        %453 = vmatpush1.msra.mxu0 0.0
        %454 = vmatprep.subr.mxu0 0.0
        %455 = vmatpush1.msra.mxu0 0.0
        %456 = vmatprep.mubr.f32.mxu0 0.0
        %457 = vmatmul.mubr.f32.gmra.mrb[0].mxu0 %v390
        %v458 = vpop.f32.mrb[0].mxu0
        %v459 = vadd.f32 %v323, %v458
        %v460 = vpop.f32.mrb[0].mxu0
        %461 = vdwg.mxu0
        %v462 = vmax.f32 %v459, 0.0
        %vm463 = vcmask 31744
        %v465 = vsel %vm463, %v462, 0
        %vm467 = vcmask 1043456
        %v469 = vsel %vm467, %v324, 0
        %471 = vmatprep.subr.mxu0 0.0
        %472 = vmatpush1.msra.mxu0 %v469
        %473 = vmatprep.subr.mxu0 0.0
        %474 = vmatpush1.msra.mxu0 0.0
        %475 = vmatprep.subr.mxu0 0.0
        %476 = vmatpush1.msra.mxu0 0.0
        %477 = vmatprep.subr.mxu0 0.0
        %478 = vmatpush1.msra.mxu0 0.0
        %479 = vmatprep.subr.mxu0 0.0
        %480 = vmatpush1.msra.mxu0 0.0
        %481 = vmatprep.subr.mxu0 0.0
        %482 = vmatpush1.msra.mxu0 0.0
        %483 = vmatprep.subr.mxu0 0.0
        %484 = vmatpush1.msra.mxu0 0.0
        %485 = vmatprep.subr.mxu0 0.0
        %486 = vmatpush1.msra.mxu0 0.0
        %487 = vmatprep.subr.mxu0 0.0
        %488 = vmatpush1.msra.mxu0 0.0
        %489 = vmatprep.subr.mxu0 0.0
        %490 = vmatpush1.msra.mxu0 0.0
        %491 = vmatprep.subr.mxu0 0.0
        %492 = vmatpush1.msra.mxu0 0.0
        %493 = vmatprep.subr.mxu0 0.0
        %494 = vmatpush1.msra.mxu0 0.0
        %495 = vmatprep.subr.mxu0 0.0
        %496 = vmatpush1.msra.mxu0 0.0
        %497 = vmatprep.subr.mxu0 0.0
        %498 = vmatpush1.msra.mxu0 0.0
        %499 = vmatprep.subr.mxu0 0.0
        %500 = vmatpush1.msra.mxu0 0.0
        %501 = vmatprep.subr.mxu0 0.0
        %502 = vmatpush1.msra.mxu0 0.0
        %503 = vmatprep.subr.mxu0 0.0
        %504 = vmatpush1.msra.mxu0 0.0
        %505 = vmatprep.subr.mxu0 0.0
        %506 = vmatpush1.msra.mxu0 0.0
        %507 = vmatprep.subr.mxu0 0.0
        %508 = vmatpush1.msra.mxu0 0.0
        %509 = vmatprep.subr.mxu0 0.0
        %510 = vmatpush1.msra.mxu0 0.0
        %511 = vmatprep.subr.mxu0 0.0
        %512 = vmatpush1.msra.mxu0 0.0
        %513 = vmatprep.subr.mxu0 0.0
        %514 = vmatpush1.msra.mxu0 0.0
        %515 = vmatprep.subr.mxu0 0.0
        %516 = vmatpush1.msra.mxu0 0.0
        %517 = vmatprep.subr.mxu0 0.0
        %518 = vmatpush1.msra.mxu0 0.0
        %519 = vmatprep.subr.mxu0 0.0
        %520 = vmatpush1.msra.mxu0 0.0
        %521 = vmatprep.subr.mxu0 0.0
        %522 = vmatpush1.msra.mxu0 0.0
        %523 = vmatprep.subr.mxu0 0.0
        %524 = vmatpush1.msra.mxu0 0.0
        %525 = vmatprep.subr.mxu0 0.0
        %526 = vmatpush1.msra.mxu0 0.0
        %527 = vmatprep.subr.mxu0 0.0
        %528 = vmatpush1.msra.mxu0 0.0
        %529 = vmatprep.subr.mxu0 0.0
        %530 = vmatpush1.msra.mxu0 0.0
        %531 = vmatprep.subr.mxu0 0.0
        %532 = vmatpush1.msra.mxu0 0.0
        %533 = vmatprep.subr.mxu0 0.0
        %534 = vmatpush1.msra.mxu0 0.0
        %535 = vmatprep.mubr.f32.mxu0 0.0
        %536 = vmatmul.mubr.f32.gmra.mrb[0].mxu0 %v465
        %v537 = vpop.f32.mrb[0].mxu0
        %v538 = vadd.f32 %v325, %v537
        %v539 = vpop.f32.mrb[0].mxu0
        %540 = vdwg.mxu0
        %v549 = vlaneseq
        %v550 = vshrl.u32 %v549, 7
        %v551 = vsub.s32 %v335, %v550
        %v552 = vrot.slane %v285, %v551
        %v553 = vlaneseq
        %v554 = vshrl.u32 %v553, 7
        %v555 = vsub.s32 %v340, %v554
        %v556 = vrot.slane %v288, %v555
        %v557 = vsel %vm345, %v556, %v552
        %v558 = vlaneseq
        %v559 = vshrl.u32 %v558, 7
        %v560 = vsub.s32 %v347, %v559
        %v561 = vrot.slane %v291, %v560
        %v562 = vsel %vm352, %v561, %v557
        %v563 = vlaneseq
        %v564 = vshrl.u32 %v563, 7
        %v565 = vsub.s32 %v354, %v564
        %v566 = vrot.slane %v294, %v565
        %v567 = vsel %vm359, %v566, %v562
        %v568 = vlaneseq
        %v569 = vshrl.u32 %v568, 7
        %v570 = vsub.s32 %v361, %v569
        %v571 = vrot.slane %v297, %v570
        %v572 = vsel %vm366, %v571, %v567
        %v573 = vlaneseq
        %v574 = vshrl.u32 %v573, 7
        %v575 = vsub.s32 %v368, %v574
        %v576 = vrot.slane %v300, %v575
        %v577 = vsel %vm373, %v576, %v572
        %v578 = vlaneseq
        %v579 = vshrl.u32 %v578, 7
        %v580 = vsub.s32 %v375, %v579
        %v581 = vrot.slane %v303, %v580
        %v582 = vsel %vm380, %v581, %v577
        %v583 = vlaneseq
        %v584 = vshrl.u32 %v583, 7
        %v585 = vsub.s32 %v382, %v584
        %v586 = vrot.slane %v306, %v585
        %v587 = vsel %vm387, %v586, %v582
        %v588 = vsel %vm389, %v587, 0
        %590 = vmatprep.subr.mxu0 0.0
        %591 = vmatpush1.msra.mxu0 %v315
        %592 = vmatprep.subr.mxu0 0.0
        %593 = vmatpush1.msra.mxu0 %v316
        %594 = vmatprep.subr.mxu0 0.0
        %595 = vmatpush1.msra.mxu0 %v317
        %596 = vmatprep.subr.mxu0 0.0
        %597 = vmatpush1.msra.mxu0 %v318
        %598 = vmatprep.subr.mxu0 0.0
        %599 = vmatpush1.msra.mxu0 %v319
        %600 = vmatprep.subr.mxu0 0.0
        %601 = vmatpush1.msra.mxu0 %v320
        %602 = vmatprep.subr.mxu0 0.0
        %603 = vmatpush1.msra.mxu0 %v321
        %604 = vmatprep.subr.mxu0 0.0
        %605 = vmatpush1.msra.mxu0 %v322
        %606 = vmatprep.subr.mxu0 0.0
        %607 = vmatpush1.msra.mxu0 0.0
        %608 = vmatprep.subr.mxu0 0.0
        %609 = vmatpush1.msra.mxu0 0.0
        %610 = vmatprep.subr.mxu0 0.0
        %611 = vmatpush1.msra.mxu0 0.0
        %612 = vmatprep.subr.mxu0 0.0
        %613 = vmatpush1.msra.mxu0 0.0
        %614 = vmatprep.subr.mxu0 0.0
        %615 = vmatpush1.msra.mxu0 0.0
        %616 = vmatprep.subr.mxu0 0.0
        %617 = vmatpush1.msra.mxu0 0.0
        %618 = vmatprep.subr.mxu0 0.0
        %619 = vmatpush1.msra.mxu0 0.0
        %620 = vmatprep.subr.mxu0 0.0
        %621 = vmatpush1.msra.mxu0 0.0
        %622 = vmatprep.subr.mxu0 0.0
        %623 = vmatpush1.msra.mxu0 0.0
        %624 = vmatprep.subr.mxu0 0.0
        %625 = vmatpush1.msra.mxu0 0.0
        %626 = vmatprep.subr.mxu0 0.0
        %627 = vmatpush1.msra.mxu0 0.0
        %628 = vmatprep.subr.mxu0 0.0
        %629 = vmatpush1.msra.mxu0 0.0
        %630 = vmatprep.subr.mxu0 0.0
        %631 = vmatpush1.msra.mxu0 0.0
        %632 = vmatprep.subr.mxu0 0.0
        %633 = vmatpush1.msra.mxu0 0.0
        %634 = vmatprep.subr.mxu0 0.0
        %635 = vmatpush1.msra.mxu0 0.0
        %636 = vmatprep.subr.mxu0 0.0
        %637 = vmatpush1.msra.mxu0 0.0
        %638 = vmatprep.subr.mxu0 0.0
        %639 = vmatpush1.msra.mxu0 0.0
        %640 = vmatprep.subr.mxu0 0.0
        %641 = vmatpush1.msra.mxu0 0.0
        %642 = vmatprep.subr.mxu0 0.0
        %643 = vmatpush1.msra.mxu0 0.0
        %644 = vmatprep.subr.mxu0 0.0
        %645 = vmatpush1.msra.mxu0 0.0
        %646 = vmatprep.subr.mxu0 0.0
        %647 = vmatpush1.msra.mxu0 0.0
        %648 = vmatprep.subr.mxu0 0.0
        %649 = vmatpush1.msra.mxu0 0.0
        %650 = vmatprep.subr.mxu0 0.0
        %651 = vmatpush1.msra.mxu0 0.0
        %652 = vmatprep.subr.mxu0 0.0
        %653 = vmatpush1.msra.mxu0 0.0
        %654 = vmatprep.mubr.f32.mxu0 0.0
        %655 = vmatmul.mubr.f32.gmra.mrb[0].mxu0 %v588
        %v656 = vpop.f32.mrb[0].mxu0
        %v657 = vadd.f32 %v323, %v656
        %v658 = vpop.f32.mrb[0].mxu0
        %659 = vdwg.mxu0
        %v660 = vmax.f32 %v657, 0.0
        %v662 = vsel %vm463, %v660, 0
        %664 = vmatprep.subr.mxu0 0.0
        %665 = vmatpush1.msra.mxu0 %v469
        %666 = vmatprep.subr.mxu0 0.0
        %667 = vmatpush1.msra.mxu0 0.0
        %668 = vmatprep.subr.mxu0 0.0
        %669 = vmatpush1.msra.mxu0 0.0
        %670 = vmatprep.subr.mxu0 0.0
        %671 = vmatpush1.msra.mxu0 0.0
        %672 = vmatprep.subr.mxu0 0.0
        %673 = vmatpush1.msra.mxu0 0.0
        %674 = vmatprep.subr.mxu0 0.0
        %675 = vmatpush1.msra.mxu0 0.0
        %676 = vmatprep.subr.mxu0 0.0
        %677 = vmatpush1.msra.mxu0 0.0
        %678 = vmatprep.subr.mxu0 0.0
        %679 = vmatpush1.msra.mxu0 0.0
        %680 = vmatprep.subr.mxu0 0.0
        %681 = vmatpush1.msra.mxu0 0.0
        %682 = vmatprep.subr.mxu0 0.0
        %683 = vmatpush1.msra.mxu0 0.0
        %684 = vmatprep.subr.mxu0 0.0
        %685 = vmatpush1.msra.mxu0 0.0
        %686 = vmatprep.subr.mxu0 0.0
        %687 = vmatpush1.msra.mxu0 0.0
        %688 = vmatprep.subr.mxu0 0.0
        %689 = vmatpush1.msra.mxu0 0.0
        %690 = vmatprep.subr.mxu0 0.0
        %691 = vmatpush1.msra.mxu0 0.0
        %692 = vmatprep.subr.mxu0 0.0
        %693 = vmatpush1.msra.mxu0 0.0
        %694 = vmatprep.subr.mxu0 0.0
        %695 = vmatpush1.msra.mxu0 0.0
        %696 = vmatprep.subr.mxu0 0.0
        %697 = vmatpush1.msra.mxu0 0.0
        %698 = vmatprep.subr.mxu0 0.0
        %699 = vmatpush1.msra.mxu0 0.0
        %700 = vmatprep.subr.mxu0 0.0
        %701 = vmatpush1.msra.mxu0 0.0
        %702 = vmatprep.subr.mxu0 0.0
        %703 = vmatpush1.msra.mxu0 0.0
        %704 = vmatprep.subr.mxu0 0.0
        %705 = vmatpush1.msra.mxu0 0.0
        %706 = vmatprep.subr.mxu0 0.0
        %707 = vmatpush1.msra.mxu0 0.0
        %708 = vmatprep.subr.mxu0 0.0
        %709 = vmatpush1.msra.mxu0 0.0
        %710 = vmatprep.subr.mxu0 0.0
        %711 = vmatpush1.msra.mxu0 0.0
        %712 = vmatprep.subr.mxu0 0.0
        %713 = vmatpush1.msra.mxu0 0.0
        %714 = vmatprep.subr.mxu0 0.0
        %715 = vmatpush1.msra.mxu0 0.0
        %716 = vmatprep.subr.mxu0 0.0
        %717 = vmatpush1.msra.mxu0 0.0
        %718 = vmatprep.subr.mxu0 0.0
        %719 = vmatpush1.msra.mxu0 0.0
        %720 = vmatprep.subr.mxu0 0.0
        %721 = vmatpush1.msra.mxu0 0.0
        %722 = vmatprep.subr.mxu0 0.0
        %723 = vmatpush1.msra.mxu0 0.0
        %724 = vmatprep.subr.mxu0 0.0
        %725 = vmatpush1.msra.mxu0 0.0
        %726 = vmatprep.subr.mxu0 0.0
        %727 = vmatpush1.msra.mxu0 0.0
        %728 = vmatprep.mubr.f32.mxu0 0.0
        %729 = vmatmul.mubr.f32.gmra.mrb[0].mxu0 %v662
        %v730 = vpop.f32.mrb[0].mxu0
        %v731 = vadd.f32 %v325, %v730
        %v732 = vpop.f32.mrb[0].mxu0
        %733 = vdwg.mxu0
        %v734 = vadd.f32 %v538, %v731
        %v735 = vxor.u32 %v734, 2147483648
        %v736 = vmul.f32 %v735, 1.442695
        %v737 = vpow.pop %v736
        %v738 = vadd.f32 %v737, 1.0
        %v739 = vrcp.pop %v738
        %v740 = vmul.f32 1.0, %v739
        %v741 = vlaneseq
        %v742 = vshrl.u32 %v741, 7
        %v743 = vsub.s32 0, %v742
        %v744 = vrot.slane %v740, %v743
        %746 = vbcast.lane.b32.xlu0 %v744, 256
        %v747 = vpop.permute.xlu0 %746
        %s749 = sor.u32 256, 8
        %750 = vbcast.lane.b32.xlu0 %v744, %s749
        %v751 = vpop.permute.xlu0 %750
        %s753 = sor.u32 256, 16
        %754 = vbcast.lane.b32.xlu0 %v744, %s753
        %v755 = vpop.permute.xlu0 %754
        %s757 = sor.u32 256, 24
        %758 = vbcast.lane.b32.xlu0 %v744, %s757
        %v759 = vpop.permute.xlu0 %758
        %s761 = sor.u32 256, 32
        %762 = vbcast.lane.b32.xlu0 %v744, %s761
        %v763 = vpop.permute.xlu0 %762
        %s765 = sor.u32 256, 40
        %766 = vbcast.lane.b32.xlu0 %v744, %s765
        %v767 = vpop.permute.xlu0 %766
        %s769 = sor.u32 256, 48
        %770 = vbcast.lane.b32.xlu0 %v744, %s769
        %v771 = vpop.permute.xlu0 %770
        %s773 = sor.u32 256, 56
        %774 = vbcast.lane.b32.xlu0 %v744, %s773
        %v775 = vpop.permute.xlu0 %774
        %v776 = vmul.f32 %v243, %v747
        %v777 = vmul.f32 %v244, %v747
        %v778 = vmul.f32 %v245, %v751
        %v779 = vmul.f32 %v246, %v751
        %v780 = vmul.f32 %v247, %v755
        %v781 = vmul.f32 %v248, %v755
        %v782 = vmul.f32 %v249, %v759
        %v783 = vmul.f32 %v250, %v759
        %v784 = vmul.f32 %v251, %v763
        %v785 = vmul.f32 %v252, %v763
        %v786 = vmul.f32 %v253, %v767
        %v787 = vmul.f32 %v254, %v767
        %v788 = vmul.f32 %v255, %v771
        %v789 = vmul.f32 %v256, %v771
        %v790 = vmul.f32 %v257, %v775
        %v791 = vmul.f32 %v258, %v775
        %792 = vst [vmem:[%s242] sm:$0xff] %v776
        %793 = vst [vmem:[%s242 + $0x8] sm:$0xff] %v777
        %794 = vst [vmem:[%s242 + $0x10] sm:$0xff] %v778
        %795 = vst [vmem:[%s242 + $0x18] sm:$0xff] %v779
        %796 = vst [vmem:[%s242 + $0x20] sm:$0xff] %v780
        %797 = vst [vmem:[%s242 + $0x28] sm:$0xff] %v781
        %798 = vst [vmem:[%s242 + $0x30] sm:$0xff] %v782
        %799 = vst [vmem:[%s242 + $0x38] sm:$0xff] %v783
        %800 = vst [vmem:[%s242 + $0x40] sm:$0xff] %v784
        %801 = vst [vmem:[%s242 + $0x48] sm:$0xff] %v785
        %802 = vst [vmem:[%s242 + $0x50] sm:$0xff] %v786
        %803 = vst [vmem:[%s242 + $0x58] sm:$0xff] %v787
        %804 = vst [vmem:[%s242 + $0x60] sm:$0xff] %v788
        %805 = vst [vmem:[%s242 + $0x68] sm:$0xff] %v789
        %806 = vst [vmem:[%s242 + $0x70] sm:$0xff] %v790
        %807 = vst [vmem:[%s242 + $0x78] sm:$0xff] %v791
        %s808 = sand.u32 %s140, 1
        %s809 = scalar_lea.sflag [#allocation4], %s808
        %s810 = sand.u32 %s140, 1
        %s811 = smul.addr %s810, 128
        %s812 = scalar_lea.vmem [#allocation5], %s811
        // Predicated region
        $region45: #{tpu_custom_call.1} parent=39 // pred_check
          %p813 = pneg %p150
        $region46: #{tpu_custom_call.1} parent=39 // pred_check_branch
          %815 = sbr.rel (%p813) target = $region48
        $region47: #{tpu_custom_call.1} parent=39 // pred_region
          %s817 = ssub.s32 2048, 2048
          %818 = vsyncadd %s809, %s817
          %s819 = smul.addr %s22, 16
          %s820 = smul.addr %s819, 128
          %s821 = scalar_lea.hbm %s5, %s820
          %s822 = sshll.u32 %s812, 4
          %s823 = int_to_ptr.vmem [resolvable:$true] %s822
          %828 = dma.vmem_to_hbm [thread:$0]  %s823, 2048, %s821, %s809, 256, 256, 16
        $region48: #{tpu_custom_call.1} parent=39 // pred_fallthru
          _
      $region40: #{tpu_custom_call.1} parent=5 // pred_fallthru
        _
      %p829 = scmp.le.s32.totalorder 2, %s17
      // Predicated region
      $region49: #{tpu_custom_call.1} parent=5 // pred_check
        %p830 = pneg %p829
      $region50: #{tpu_custom_call.1} parent=5 // pred_check_branch
        %832 = sbr.rel (%p830) target = $region52
      $region51: #{tpu_custom_call.1} parent=5 // pred_region
        %s833 = ssub.s32 %s17, 2
        // Predicated region
        $region53: #{tpu_custom_call.1} parent=51 // pred_check
          %p834 = pneg %p156
        $region54: #{tpu_custom_call.1} parent=51 // pred_check_branch
          %836 = sbr.rel (%p834) target = $region56
        $region55: #{tpu_custom_call.1} parent=51 // pred_region
          %s837 = sand.u32 %s141, 1
          %s838 = scalar_lea.sflag [#allocation4], %s837
          %s839 = sand.u32 %s141, 1
          %s840 = smul.addr %s839, 128
          %s841 = scalar_lea.vmem [#allocation5], %s840
          %842 = dma.done %s838, 2048
        $region56: #{tpu_custom_call.1} parent=51 // pred_fallthru
          _
      $region52: #{tpu_custom_call.1} parent=5 // pred_fallthru
        _
    $region6: #{tpu_custom_call.1} parent=1 // loop_footer
      %s21 = sadd.s32 1, %s17
    $region7: #{tpu_custom_call.1} parent=1 // loop_footer_branch
      %16 = sbr.rel target = $region3
    $region8: #{tpu_custom_call.1} parent=1 // loop_exit
      _
    %843 = vsyncpa [#allocation3], 1
    %s844 = scalar_lea.sflag [#allocation3], 1
    %845 = vsyncpa %s844, 1
    %846 = vsyncpa [#allocation4], 1
    %s847 = scalar_lea.sflag [#allocation4], 1
    %848 = vsyncpa %s847, 1

</llo_original>
